<compile_context>
chip_gen: v7x
topology: tpu7x:2x2x1
jax: 0.10.0
libtpu: 0.0.40
codegen_flags: <defaults>
</compile_context>

<pallas_src>
import functools

import numpy as np
import jax
import jax.numpy as jnp
from jax.experimental import pallas as pl
from jax.experimental.pallas import tpu as pltpu

LANE = 128
NEG_INF = -1e30


def _round_up(x, m):
    return (x + m - 1) // m * m


# ----------------------------------------------------------------------------
# Kernel A: per-node linear transform + attention projections.
# ----------------------------------------------------------------------------
def node_transform_kernel(x_ref, w_ref, wd_ref, wst_ref,
                          xw_ref, adst_ref, asrct_ref):
    x = x_ref[...]                                           # (Ti, F_pad)
    xw_ref[...] = jnp.dot(x, w_ref[...],
                          preferred_element_type=jnp.float32)     # (Ti, HC_pad)
    adst_ref[...] = jnp.dot(x, wd_ref[...],
                            preferred_element_type=jnp.float32)   # (Ti, H)
    # a_src^T = Ws^T @ x^T  -- contract the feature axis of both operands so
    # the result keeps nodes on the lane axis (lane-dense for the softmax).
    asrct_ref[...] = jax.lax.dot_general(
        wst_ref[...], x, dimension_numbers=(((1,), (1,)), ((), ())),
        preferred_element_type=jnp.float32)                       # (H, Ti)


# ----------------------------------------------------------------------------
# Kernel B: masked softmax over incoming edges + per-head aggregation.
# ----------------------------------------------------------------------------
def gat_attn_kernel(adst_ref, asrct_ref, xw_ref, adjb_ref, bias_ref, out_ref,
                    *, heads, out_ch, concat, neg_slope, out_dim, apply_relu):
    a_dst = adst_ref[...]                                    # (Ti, H)
    a_srct = asrct_ref[...]                                  # (H, N_pad)
    adj_bias = adjb_ref[...].astype(jnp.float32)             # (Ti, N_pad)
    xw = xw_ref[...]                                         # (N_pad, HC_pad)

    cols = []
    for h in range(heads):                                   # static unroll
        e = a_dst[:, h:h + 1] + a_srct[h:h + 1, :]           # (Ti, N_pad)
        e = jnp.where(e >= 0, e, neg_slope * e)              # leaky_relu
        e = e + adj_bias                                     # additive mask
        m = jnp.max(e, axis=1, keepdims=True)                # (Ti, 1)
        p = jnp.exp(e - m)                                   # masked -> 0
        denom = jnp.sum(p, axis=1, keepdims=True)            # >= 1 (row max)
        alpha = p * pl.reciprocal(denom, approx=True)        # EUP reciprocal
        x_h = xw[:, h * out_ch:(h + 1) * out_ch]             # (N_pad, C)
        cols.append(jnp.dot(alpha, x_h,
                            preferred_element_type=jnp.float32))  # (Ti, C)

    if concat:
        out = jnp.concatenate(cols, axis=-1)                 # (Ti, H*C)
    else:
        acc = cols[0]
        for h in range(1, heads):
            acc = acc + cols[h]
        out = acc * (1.0 / heads)                            # (Ti, C)

    ti = out.shape[0]
    d_pad = out_ref.shape[-1]
    if out_dim < d_pad:                                      # lane-dense store
        out = jnp.concatenate(
            [out, jnp.zeros((ti, d_pad - out_dim), jnp.float32)], axis=-1)
    out = out + bias_ref[...]
    if apply_relu:                                           # fused ReLU
        out = jnp.maximum(out, 0.0)
    out_ref[...] = out


# ----------------------------------------------------------------------------
# Layer wrapper.
# ----------------------------------------------------------------------------
def gat_conv(x_pad, adj_bias, layer, *, n_pad, tile, apply_relu):
    heads, c = layer["heads"], layer["out_ch"]
    concat = layer["concat"]
    f_pad = x_pad.shape[1]
    assert f_pad == layer["w_pad"].shape[0]
    hc_pad = layer["w_pad"].shape[1]
    out_dim = heads * c if concat else c
    d_pad = _round_up(out_dim, LANE)
    grid = (n_pad // tile,)
    cparams = pltpu.CompilerParams(dimension_semantics=("parallel",))

    xw, a_dst, a_srct = pl.pallas_call(
        node_transform_kernel,
        grid=grid,
        in_specs=[
            pl.BlockSpec((tile, f_pad), lambda i: (i, 0)),      # x tile
            pl.BlockSpec((f_pad, hc_pad), lambda i: (0, 0)),    # W
            pl.BlockSpec((f_pad, heads), lambda i: (0, 0)),     # Wd
            pl.BlockSpec((heads, f_pad), lambda i: (0, 0)),     # Ws^T
        ],
        out_specs=[
            pl.BlockSpec((tile, hc_pad), lambda i: (i, 0)),     # xW
            pl.BlockSpec((tile, heads), lambda i: (i, 0)),      # a_dst
            pl.BlockSpec((heads, tile), lambda i: (0, i)),      # a_src^T
        ],
        out_shape=[
            jax.ShapeDtypeStruct((n_pad, hc_pad), jnp.float32),
            jax.ShapeDtypeStruct((n_pad, heads), jnp.float32),
            jax.ShapeDtypeStruct((heads, n_pad), jnp.float32),
        ],
        compiler_params=cparams,
    )(x_pad, layer["w_pad"], layer["wd_pad"], layer["wst_pad"])

    kernel = functools.partial(
        gat_attn_kernel, heads=heads, out_ch=c, concat=concat,
        neg_slope=layer["neg_slope"], out_dim=out_dim, apply_relu=apply_relu)
    out = pl.pallas_call(
        kernel,
        grid=grid,
        in_specs=[
            pl.BlockSpec((tile, heads), lambda i: (i, 0)),      # a_dst tile
            pl.BlockSpec((heads, n_pad), lambda i: (0, 0)),     # a_src^T (all)
            pl.BlockSpec((n_pad, hc_pad), lambda i: (0, 0)),    # xW (all j)
            pl.BlockSpec((tile, n_pad), lambda i: (i, 0)),      # adj bias tile
            pl.BlockSpec((1, d_pad), lambda i: (0, 0)),         # bias
        ],
        out_specs=pl.BlockSpec((tile, d_pad), lambda i: (i, 0)),
        out_shape=jax.ShapeDtypeStruct((n_pad, d_pad), jnp.float32),
        compiler_params=cparams,
    )(a_dst, a_srct, xw, adj_bias, layer["bias_pad"])
    return out, out_dim


# ----------------------------------------------------------------------------
# Parameter init (glorot-uniform like PyG) + folding/padding for the kernels.
# ----------------------------------------------------------------------------
def glorot(key, shape):
    fan = shape[-2] + shape[-1]
    a = np.sqrt(6.0 / fan)
    return jax.random.uniform(key, shape, jnp.float32, -a, a)


def init_gat_params(key, in_feats=1, h_feats=(8, 8, 1), heads=(8, 8, 4),
                    neg_slope=0.2):
    layers = []
    f_in = in_feats
    for i, (c, h) in enumerate(zip(h_feats, heads)):
        last = i + 1 == len(h_feats)
        concat = not last
        key, k_w, k_a = jax.random.split(key, 3)
        w = glorot(k_w, (f_in, h * c))                 # (F_in, H*C)
        att = glorot(k_a, (1, h, 2 * c))               # (1, H, 2C)
        out_dim = h * c if concat else c
        bias = jnp.zeros((out_dim,), jnp.float32)

        att_dst = att[0, :, :c]                        # applied to x_i (target)
        att_src = att[0, :, c:]                        # applied to x_j (source)
        w3 = w.reshape(f_in, h, c)
        wd = jnp.einsum("fhc,hc->fh", w3, att_dst)     # (F_in, H)
        ws = jnp.einsum("fhc,hc->fh", w3, att_src)     # (F_in, H)

        f_pad = _round_up(f_in, LANE)
        hc_pad = _round_up(h * c, LANE)
        d_pad = _round_up(out_dim, LANE)

        w_pad = jnp.zeros((f_pad, hc_pad), jnp.float32).at[:f_in, :h * c].set(w)
        wd_pad = jnp.zeros((f_pad, h), jnp.float32).at[:f_in, :].set(wd)
        wst_pad = jnp.zeros((h, f_pad), jnp.float32).at[:, :f_in].set(ws.T)
        bias_pad = jnp.zeros((1, d_pad), jnp.float32).at[0, :out_dim].set(bias)

        layers.append(dict(heads=h, out_ch=c, concat=concat,
                           neg_slope=neg_slope, w_pad=w_pad, wd_pad=wd_pad,
                           wst_pad=wst_pad, bias_pad=bias_pad))
        f_in = h * c
    return layers


# ----------------------------------------------------------------------------
# Graph glue: dense additive adjacency bias with self-loops (PyG's
# remove_self_loops + add_self_loops), built once and reused by all layers.
# ----------------------------------------------------------------------------
def adjacency_bias(edge_index, num_nodes, n_pad):
    src = np.asarray(edge_index[0])
    dst = np.asarray(edge_index[1])
    adj = np.zeros((num_nodes, num_nodes), np.float32)
    keep = src != dst
    adj[dst[keep], src[keep]] = 1.0     # adj[target, source] = 1
    np.fill_diagonal(adj, 1.0)          # add self-loops
    bias = np.full((n_pad, n_pad), NEG_INF, np.float32)
    bias[:num_nodes, :num_nodes] = np.where(adj > 0, 0.0, NEG_INF)
    return jnp.asarray(bias, jnp.bfloat16)


def gat_forward(X, adj_bias, layers, *, tile=LANE):
    n, f_in = X.shape
    n_pad = adj_bias.shape[0]
    f_pad = _round_up(f_in, LANE)
    x = jnp.zeros((n_pad, f_pad), jnp.float32).at[:n, :f_in].set(
        X.astype(jnp.float32))
    out_dim = f_in
    for i, layer in enumerate(layers):
        last = i + 1 == len(layers)
        x, out_dim = gat_conv(x, adj_bias, layer, n_pad=n_pad, tile=tile,
                              apply_relu=not last)
        # TODO(synk): inter-layer dropout is identity at inference.
    return x[:n, :out_dim]


# ----------------------------------------------------------------------------
if __name__ == "__main__":
    key = jax.random.PRNGKey(0)
    key, k_x = jax.random.split(key)

    N = 16
    in_feats = 1
    X = jax.random.normal(k_x, (N, in_feats), jnp.float32)

    # Small deterministic graph: bidirectional ring.
    src = np.arange(N)
    dst = (src + 1) % N
    edge_index = np.stack([np.concatenate([src, dst]),
                           np.concatenate([dst, src])], axis=0)  # (2, 32)

    n_pad = _round_up(max(N, LANE), LANE)
    adj_bias = adjacency_bias(edge_index, N, n_pad)

    layers = init_gat_params(key, in_feats=in_feats,
                             h_feats=(8, 8, 1), heads=(8, 8, 4))

    out = gat_forward(X, adj_bias, layers)
    out = jax.block_until_ready(out)
    assert out.shape == (N, 1), out.shape
    assert bool(jnp.all(jnp.isfinite(out)))
    print("KERNEL_OK")
</pallas_src>

<mosaic_0001>
module attributes {stable_mosaic.version = 11 : i64} {
  func.func @node_transform_kernel(%arg0: i32, %arg1: memref<128x128xf32, #tpu.memory_space<vmem>>, %arg2: memref<128x128xf32, #tpu.memory_space<vmem>>, %arg3: memref<128x8xf32, #tpu.memory_space<vmem>>, %arg4: memref<8x128xf32, #tpu.memory_space<vmem>>, %arg5: memref<128x128xf32, #tpu.memory_space<vmem>>, %arg6: memref<128x8xf32, #tpu.memory_space<vmem>>, %arg7: memref<8x128xf32, #tpu.memory_space<vmem>>) attributes {dimension_semantics = [#tpu.dimension_semantics<parallel>], iteration_bounds = array<i64: 1>, scalar_prefetch = 0 : i64, scratch_operands = 0 : i64, tpu.core_type = #tpu.core_type<tc>, window_params = [{transform_indices = @transform_0, window_bounds = array<i64: 128, 128>}, {pipeline_mode = #tpu.pipeline_mode<synchronous>, transform_indices = @transform_1, window_bounds = array<i64: 128, 128>}, {pipeline_mode = #tpu.pipeline_mode<synchronous>, transform_indices = @transform_2, window_bounds = array<i64: 128, 8>}, {pipeline_mode = #tpu.pipeline_mode<synchronous>, transform_indices = @transform_3, window_bounds = array<i64: 8, 128>}, {transform_indices = @transform_4, window_bounds = array<i64: 128, 128>}, {transform_indices = @transform_5, window_bounds = array<i64: 128, 8>}, {transform_indices = @transform_6, window_bounds = array<i64: 8, 128>}]} {
    %c0 = arith.constant 0 : index
    %c0_0 = arith.constant 0 : index
    %0 = vector.load %arg1[%c0, %c0_0] : memref<128x128xf32, #tpu.memory_space<vmem>>, vector<128x128xf32>
    %c0_1 = arith.constant 0 : index
    %c0_2 = arith.constant 0 : index
    %1 = vector.load %arg2[%c0_1, %c0_2] : memref<128x128xf32, #tpu.memory_space<vmem>>, vector<128x128xf32>
    %cst = arith.constant dense<0.000000e+00> : vector<128x128xf32>
    %2 = tpu.matmul %0, %1, %cst {dimension_numbers = #tpu.dot_dimension_numbers<[1], [0], [0], [1], [0, 0, 1, 1], [], []>} : vector<128x128xf32>, vector<128x128xf32>, vector<128x128xf32> -> vector<128x128xf32>
    %c0_3 = arith.constant 0 : index
    %c0_4 = arith.constant 0 : index
    %3 = vector.load %arg5[%c0_3, %c0_4] : memref<128x128xf32, #tpu.memory_space<vmem>>, vector<128x128xf32>
    tpu.vector_store %arg5[%c0_3, %c0_4], %2 {strides = array<i32>} : memref<128x128xf32, #tpu.memory_space<vmem>>, vector<128x128xf32>,
    %c0_5 = arith.constant 0 : index
    %c0_6 = arith.constant 0 : index
    %4 = vector.load %arg3[%c0_5, %c0_6] : memref<128x8xf32, #tpu.memory_space<vmem>>, vector<128x8xf32>
    %cst_7 = arith.constant dense<0.000000e+00> : vector<128x8xf32>
    %5 = tpu.matmul %0, %4, %cst_7 {dimension_numbers = #tpu.dot_dimension_numbers<[1], [0], [0], [1], [0, 0, 1, 1], [], []>} : vector<128x128xf32>, vector<128x8xf32>, vector<128x8xf32> -> vector<128x8xf32>
    %c0_8 = arith.constant 0 : index
    %c0_9 = arith.constant 0 : index
    %6 = vector.load %arg6[%c0_8, %c0_9] : memref<128x8xf32, #tpu.memory_space<vmem>>, vector<128x8xf32>
    tpu.vector_store %arg6[%c0_8, %c0_9], %5 {strides = array<i32>} : memref<128x8xf32, #tpu.memory_space<vmem>>, vector<128x8xf32>,
    %c0_10 = arith.constant 0 : index
    %c0_11 = arith.constant 0 : index
    %7 = vector.load %arg4[%c0_10, %c0_11] : memref<8x128xf32, #tpu.memory_space<vmem>>, vector<8x128xf32>
    %cst_12 = arith.constant dense<0.000000e+00> : vector<8x128xf32>
    %8 = tpu.matmul %7, %0, %cst_12 {dimension_numbers = #tpu.dot_dimension_numbers<[1], [1], [0], [0], [0, 0, 1, 0], [], []>} : vector<8x128xf32>, vector<128x128xf32>, vector<8x128xf32> -> vector<8x128xf32>
    %c0_13 = arith.constant 0 : index
    %c0_14 = arith.constant 0 : index
    %9 = vector.load %arg7[%c0_13, %c0_14] : memref<8x128xf32, #tpu.memory_space<vmem>>, vector<8x128xf32>
    tpu.vector_store %arg7[%c0_13, %c0_14], %8 {strides = array<i32>} : memref<8x128xf32, #tpu.memory_space<vmem>>, vector<8x128xf32>,
    return
  }
  func.func @transform_0(%arg0: i32) -> (i32, i32) {
    %c0_i32 = arith.constant 0 : i32
    %c0_i32_0 = arith.constant 0 : i32
    return %arg0, %c0_i32 : i32, i32
  }
  func.func @transform_1(%arg0: i32) -> (i32, i32) {
    %c0_i32 = arith.constant 0 : i32
    %c0_i32_0 = arith.constant 0 : i32
    %c0_i32_1 = arith.constant 0 : i32
    return %c0_i32, %c0_i32_0 : i32, i32
  }
  func.func @transform_2(%arg0: i32) -> (i32, i32) {
    %c0_i32 = arith.constant 0 : i32
    %c0_i32_0 = arith.constant 0 : i32
    %c0_i32_1 = arith.constant 0 : i32
    return %c0_i32, %c0_i32_0 : i32, i32
  }
  func.func @transform_3(%arg0: i32) -> (i32, i32) {
    %c0_i32 = arith.constant 0 : i32
    %c0_i32_0 = arith.constant 0 : i32
    %c0_i32_1 = arith.constant 0 : i32
    return %c0_i32, %c0_i32_0 : i32, i32
  }
  func.func @transform_4(%arg0: i32) -> (i32, i32) {
    %c0_i32 = arith.constant 0 : i32
    %c0_i32_0 = arith.constant 0 : i32
    return %arg0, %c0_i32 : i32, i32
  }
  func.func @transform_5(%arg0: i32) -> (i32, i32) {
    %c0_i32 = arith.constant 0 : i32
    %c0_i32_0 = arith.constant 0 : i32
    return %arg0, %c0_i32 : i32, i32
  }
  func.func @transform_6(%arg0: i32) -> (i32, i32) {
    %c0_i32 = arith.constant 0 : i32
    %c0_i32_0 = arith.constant 0 : i32
    return %c0_i32, %arg0 : i32, i32
  }
}

</mosaic_0001>

<llo_original>
// kernel: tpu_custom_call.1
$region0: #{tpu_custom_call.1}
  #allocation0 [shape = 'u32[]', space=smem, size = 0x4, offset = 0x4, fixed_abs, tag = 'smem constant byte address 0x4 - core index']
  #allocation1 [shape = 'u32[144,128]{1,0:T(1,128)}', space=vmem, size = 0x12000, scoped, tag = 'internal scratch']
  %s0 = inlined_call_operand.vmem [shape: f32[128,128], index: 0, kind: input, shape index: {}]
  %s1 = inlined_call_operand.hbm [shape: f32[128,128], index: 1, kind: input, shape index: {}]
  %s2 = inlined_call_operand.vmem [shape: f32[128,8], index: 2, kind: input, shape index: {}]
  %s3 = inlined_call_operand.vmem [shape: f32[8,128], index: 3, kind: input, shape index: {}]
  %s4 = inlined_call_operand.hbm [shape: f32[128,128], index: 4, kind: output, shape index: {0}]
  %s5 = inlined_call_operand.vmem [shape: f32[128,8], index: 5, kind: output, shape index: {1}]
  %s6 = inlined_call_operand.hbm [shape: f32[8,128], index: 6, kind: output, shape index: {2}]
  %7 = xla_tuple %s4, %s5, %s6
  %s8 = sld [smem:[#allocation0]]
  $region46: #{tpu_custom_call.1} parent=0
    _
  %s10 = ssub.s32 1, %s8
  %s11 = scalar_select 0, %s10, %s8
  $region1: #{tpu_custom_call.1} parent=0
    #allocation2 [shape = 'u8[65536]{0}', space=vmem, size = 0x10000, scoped, tag = 'input window, operand 1, single buffered']
    #allocation3 [shape = 's32[1]{0}', space=sflag, size = 0x4, scoped, tag = 'scoped memory for tpu_custom_call.1']
    #allocation4 [shape = 's32[1]{0}', space=sflag, size = 0x4, scoped, tag = 'scoped memory for tpu_custom_call.1']
    #allocation5 [shape = 'u8[65536]{0}', space=vmem, size = 0x10000, scoped, tag = 'output window, operand 0, single buffered']
    #allocation6 [shape = 'u8[4096]{0}', space=vmem, size = 0x1000, scoped, tag = 'output window, operand 2, single buffered']
    #allocation7 [shape = 's32[1]{0}', space=sflag, size = 0x4, scoped, tag = 'scoped memory for tpu_custom_call.1']
    %12 = vsyncpa [#allocation3], 0
    %13 = vsyncpa [#allocation4], 0
    %14 = vsyncpa [#allocation7], 0
    // Predicated region
    $region2: #{tpu_custom_call.1} parent=1 // pred_check
      _
    $region3: #{tpu_custom_call.1} parent=1 // pred_check_branch
      %16 = sbr.rel (0) target = $region5
    $region4: #{tpu_custom_call.1} parent=1 // pred_region
      _
    $region5: #{tpu_custom_call.1} parent=1 // pred_fallthru
      _
    // Predicated region
    $region6: #{tpu_custom_call.1} parent=1 // pred_check
      _
    $region7: #{tpu_custom_call.1} parent=1 // pred_check_branch
      %18 = sbr.rel (0) target = $region9
    $region8: #{tpu_custom_call.1} parent=1 // pred_region
      %s20 = ssub.s32 2048, 2048
      %21 = vsyncadd [#allocation3], %s20
      %s22 = sshll.u32 [#allocation2], 4
      %s23 = int_to_ptr.vmem [resolvable:$true] %s22
      %28 = dma.hbm_to_vmem [thread:$0]  %s1, 2048, %s23, [#allocation3], 128, 128, 8
    $region9: #{tpu_custom_call.1} parent=1 // pred_fallthru
      _
    // Predicated region
    $region10: #{tpu_custom_call.1} parent=1 // pred_check
      _
    $region11: #{tpu_custom_call.1} parent=1 // pred_check_branch
      %30 = sbr.rel (0) target = $region13
    $region12: #{tpu_custom_call.1} parent=1 // pred_region
      _
    $region13: #{tpu_custom_call.1} parent=1 // pred_fallthru
      _
    // Predicated region
    $region14: #{tpu_custom_call.1} parent=1 // pred_check
      _
    $region15: #{tpu_custom_call.1} parent=1 // pred_check_branch
      %32 = sbr.rel (0) target = $region17
    $region16: #{tpu_custom_call.1} parent=1 // pred_region
      _
    $region17: #{tpu_custom_call.1} parent=1 // pred_fallthru
      _
    // Predicated region
    $region18: #{tpu_custom_call.1} parent=1 // pred_check
      _
    $region19: #{tpu_custom_call.1} parent=1 // pred_check_branch
      %34 = sbr.rel (0) target = $region21
    $region20: #{tpu_custom_call.1} parent=1 // pred_region
      %35 = dma.done [#allocation3], 2048
    $region21: #{tpu_custom_call.1} parent=1 // pred_fallthru
      _
    %v36 = vld [vmem:[%s0] sm:$0xff]
    %v37 = vld [vmem:[%s0 + $0x8] sm:$0xff]
    %v38 = vld [vmem:[%s0 + $0x10] sm:$0xff]
    %v39 = vld [vmem:[%s0 + $0x18] sm:$0xff]
    %v40 = vld [vmem:[%s0 + $0x20] sm:$0xff]
    %v41 = vld [vmem:[%s0 + $0x28] sm:$0xff]
    %v42 = vld [vmem:[%s0 + $0x30] sm:$0xff]
    %v43 = vld [vmem:[%s0 + $0x38] sm:$0xff]
    %v44 = vld [vmem:[%s0 + $0x40] sm:$0xff]
    %v45 = vld [vmem:[%s0 + $0x48] sm:$0xff]
    %v46 = vld [vmem:[%s0 + $0x50] sm:$0xff]
    %v47 = vld [vmem:[%s0 + $0x58] sm:$0xff]
    %v48 = vld [vmem:[%s0 + $0x60] sm:$0xff]
    %v49 = vld [vmem:[%s0 + $0x68] sm:$0xff]
    %v50 = vld [vmem:[%s0 + $0x70] sm:$0xff]
    %v51 = vld [vmem:[%s0 + $0x78] sm:$0xff]
    %v52 = vld [vmem:[#allocation2] sm:$0xff]
    %v53 = vld [vmem:[#allocation2 + $0x8] sm:$0xff]
    %v54 = vld [vmem:[#allocation2 + $0x10] sm:$0xff]
    %v55 = vld [vmem:[#allocation2 + $0x18] sm:$0xff]
    %v56 = vld [vmem:[#allocation2 + $0x20] sm:$0xff]
    %v57 = vld [vmem:[#allocation2 + $0x28] sm:$0xff]
    %v58 = vld [vmem:[#allocation2 + $0x30] sm:$0xff]
    %v59 = vld [vmem:[#allocation2 + $0x38] sm:$0xff]
    %v60 = vld [vmem:[#allocation2 + $0x40] sm:$0xff]
    %v61 = vld [vmem:[#allocation2 + $0x48] sm:$0xff]
    %v62 = vld [vmem:[#allocation2 + $0x50] sm:$0xff]
    %v63 = vld [vmem:[#allocation2 + $0x58] sm:$0xff]
    %v64 = vld [vmem:[#allocation2 + $0x60] sm:$0xff]
    %v65 = vld [vmem:[#allocation2 + $0x68] sm:$0xff]
    %v66 = vld [vmem:[#allocation2 + $0x70] sm:$0xff]
    %v67 = vld [vmem:[#allocation2 + $0x78] sm:$0xff]
    %68 = vmatprep.subr.mxu0 0.0
    %69 = vmatpush1.msra.mxu0 %v52
    %70 = vmatprep.subr.mxu0 0.0
    %71 = vmatpush1.msra.mxu0 %v53
    %72 = vmatprep.subr.mxu0 0.0
    %73 = vmatpush1.msra.mxu0 %v54
    %74 = vmatprep.subr.mxu0 0.0
    %75 = vmatpush1.msra.mxu0 %v55
    %76 = vmatprep.subr.mxu0 0.0
    %77 = vmatpush1.msra.mxu0 %v56
    %78 = vmatprep.subr.mxu0 0.0
    %79 = vmatpush1.msra.mxu0 %v57
    %80 = vmatprep.subr.mxu0 0.0
    %81 = vmatpush1.msra.mxu0 %v58
    %82 = vmatprep.subr.mxu0 0.0
    %83 = vmatpush1.msra.mxu0 %v59
    %84 = vmatprep.subr.mxu0 0.0
    %85 = vmatpush1.msra.mxu0 %v60
    %86 = vmatprep.subr.mxu0 0.0
    %87 = vmatpush1.msra.mxu0 %v61
    %88 = vmatprep.subr.mxu0 0.0
    %89 = vmatpush1.msra.mxu0 %v62
    %90 = vmatprep.subr.mxu0 0.0
    %91 = vmatpush1.msra.mxu0 %v63
    %92 = vmatprep.subr.mxu0 0.0
    %93 = vmatpush1.msra.mxu0 %v64
    %94 = vmatprep.subr.mxu0 0.0
    %95 = vmatpush1.msra.mxu0 %v65
    %96 = vmatprep.subr.mxu0 0.0
    %97 = vmatpush1.msra.mxu0 %v66
    %98 = vmatprep.subr.mxu0 0.0
    %99 = vmatpush1.msra.mxu0 %v67
    %100 = vmatprep.subr.mxu0 0.0
    %101 = vmatpush1.msra.mxu0 0.0
    %102 = vmatprep.subr.mxu0 0.0
    %103 = vmatpush1.msra.mxu0 0.0
    %104 = vmatprep.subr.mxu0 0.0
    %105 = vmatpush1.msra.mxu0 0.0
    %106 = vmatprep.subr.mxu0 0.0
    %107 = vmatpush1.msra.mxu0 0.0
    %108 = vmatprep.subr.mxu0 0.0
    %109 = vmatpush1.msra.mxu0 0.0
    %110 = vmatprep.subr.mxu0 0.0
    %111 = vmatpush1.msra.mxu0 0.0
    %112 = vmatprep.subr.mxu0 0.0
    %113 = vmatpush1.msra.mxu0 0.0
    %114 = vmatprep.subr.mxu0 0.0
    %115 = vmatpush1.msra.mxu0 0.0
    %116 = vmatprep.subr.mxu0 0.0
    %117 = vmatpush1.msra.mxu0 0.0
    %118 = vmatprep.subr.mxu0 0.0
    %119 = vmatpush1.msra.mxu0 0.0
    %120 = vmatprep.subr.mxu0 0.0
    %121 = vmatpush1.msra.mxu0 0.0
    %122 = vmatprep.subr.mxu0 0.0
    %123 = vmatpush1.msra.mxu0 0.0
    %124 = vmatprep.subr.mxu0 0.0
    %125 = vmatpush1.msra.mxu0 0.0
    %126 = vmatprep.subr.mxu0 0.0
    %127 = vmatpush1.msra.mxu0 0.0
    %128 = vmatprep.subr.mxu0 0.0
    %129 = vmatpush1.msra.mxu0 0.0
    %130 = vmatprep.subr.mxu0 0.0
    %131 = vmatpush1.msra.mxu0 0.0
    %132 = vmatprep.mubr.f32.mxu0 0.0
    %133 = vmatmul.mubr.f32.gmra.mrb[0].mxu0 %v36
    %v134 = vpop.f32.mrb[0].mxu0
    %v135 = vadd.f32 0.0, %v134
    %v136 = vpop.f32.mrb[0].mxu0
    %137 = vmatprep.mubr.f32.mxu0 0.0
    %138 = vmatmul.mubr.f32.gmra.mrb[0].mxu0 %v37
    %v139 = vpop.f32.mrb[0].mxu0
    %v140 = vadd.f32 0.0, %v139
    %v141 = vpop.f32.mrb[0].mxu0
    %142 = vmatprep.mubr.f32.mxu0 0.0
    %143 = vmatmul.mubr.f32.gmra.mrb[0].mxu0 %v38
    %v144 = vpop.f32.mrb[0].mxu0
    %v145 = vadd.f32 0.0, %v144
    %v146 = vpop.f32.mrb[0].mxu0
    %147 = vmatprep.mubr.f32.mxu0 0.0
    %148 = vmatmul.mubr.f32.gmra.mrb[0].mxu0 %v39
    %v149 = vpop.f32.mrb[0].mxu0
    %v150 = vadd.f32 0.0, %v149
    %v151 = vpop.f32.mrb[0].mxu0
    %152 = vmatprep.mubr.f32.mxu0 0.0
    %153 = vmatmul.mubr.f32.gmra.mrb[0].mxu0 %v40
    %v154 = vpop.f32.mrb[0].mxu0
    %v155 = vadd.f32 0.0, %v154
    %v156 = vpop.f32.mrb[0].mxu0
    %157 = vmatprep.mubr.f32.mxu0 0.0
    %158 = vmatmul.mubr.f32.gmra.mrb[0].mxu0 %v41
    %v159 = vpop.f32.mrb[0].mxu0
    %v160 = vadd.f32 0.0, %v159
    %v161 = vpop.f32.mrb[0].mxu0
    %162 = vmatprep.mubr.f32.mxu0 0.0
    %163 = vmatmul.mubr.f32.gmra.mrb[0].mxu0 %v42
    %v164 = vpop.f32.mrb[0].mxu0
    %v165 = vadd.f32 0.0, %v164
    %v166 = vpop.f32.mrb[0].mxu0
    %167 = vmatprep.mubr.f32.mxu0 0.0
    %168 = vmatmul.mubr.f32.gmra.mrb[0].mxu0 %v43
    %v169 = vpop.f32.mrb[0].mxu0
    %v170 = vadd.f32 0.0, %v169
    %v171 = vpop.f32.mrb[0].mxu0
    %172 = vmatprep.mubr.f32.mxu0 0.0
    %173 = vmatmul.mubr.f32.gmra.mrb[0].mxu0 %v44
    %v174 = vpop.f32.mrb[0].mxu0
    %v175 = vadd.f32 0.0, %v174
    %v176 = vpop.f32.mrb[0].mxu0
    %177 = vmatprep.mubr.f32.mxu0 0.0
    %178 = vmatmul.mubr.f32.gmra.mrb[0].mxu0 %v45
    %v179 = vpop.f32.mrb[0].mxu0
    %v180 = vadd.f32 0.0, %v179
    %v181 = vpop.f32.mrb[0].mxu0
    %182 = vmatprep.mubr.f32.mxu0 0.0
    %183 = vmatmul.mubr.f32.gmra.mrb[0].mxu0 %v46
    %v184 = vpop.f32.mrb[0].mxu0
    %v185 = vadd.f32 0.0, %v184
    %v186 = vpop.f32.mrb[0].mxu0
    %187 = vmatprep.mubr.f32.mxu0 0.0
    %188 = vmatmul.mubr.f32.gmra.mrb[0].mxu0 %v47
    %v189 = vpop.f32.mrb[0].mxu0
    %v190 = vadd.f32 0.0, %v189
    %v191 = vpop.f32.mrb[0].mxu0
    %192 = vmatprep.mubr.f32.mxu0 0.0
    %193 = vmatmul.mubr.f32.gmra.mrb[0].mxu0 %v48
    %v194 = vpop.f32.mrb[0].mxu0
    %v195 = vadd.f32 0.0, %v194
    %v196 = vpop.f32.mrb[0].mxu0
    %197 = vmatprep.mubr.f32.mxu0 0.0
    %198 = vmatmul.mubr.f32.gmra.mrb[0].mxu0 %v49
    %v199 = vpop.f32.mrb[0].mxu0
    %v200 = vadd.f32 0.0, %v199
    %v201 = vpop.f32.mrb[0].mxu0
    %202 = vmatprep.mubr.f32.mxu0 0.0
    %203 = vmatmul.mubr.f32.gmra.mrb[0].mxu0 %v50
    %v204 = vpop.f32.mrb[0].mxu0
    %v205 = vadd.f32 0.0, %v204
    %v206 = vpop.f32.mrb[0].mxu0
    %207 = vmatprep.mubr.f32.mxu0 0.0
    %208 = vmatmul.mubr.f32.gmra.mrb[0].mxu0 %v51
    %v209 = vpop.f32.mrb[0].mxu0
    %v210 = vadd.f32 0.0, %v209
    %v211 = vpop.f32.mrb[0].mxu0
    %212 = vdwg.mxu0
    %213 = vst [vmem:[#allocation5] sm:$0xff] %v135
    %214 = vst [vmem:[#allocation5 + $0x8] sm:$0xff] %v140
    %215 = vst [vmem:[#allocation5 + $0x10] sm:$0xff] %v145
    %216 = vst [vmem:[#allocation5 + $0x18] sm:$0xff] %v150
    %217 = vst [vmem:[#allocation5 + $0x20] sm:$0xff] %v155
    %218 = vst [vmem:[#allocation5 + $0x28] sm:$0xff] %v160
    %219 = vst [vmem:[#allocation5 + $0x30] sm:$0xff] %v165
    %220 = vst [vmem:[#allocation5 + $0x38] sm:$0xff] %v170
    %221 = vst [vmem:[#allocation5 + $0x40] sm:$0xff] %v175
    %222 = vst [vmem:[#allocation5 + $0x48] sm:$0xff] %v180
    %223 = vst [vmem:[#allocation5 + $0x50] sm:$0xff] %v185
    %224 = vst [vmem:[#allocation5 + $0x58] sm:$0xff] %v190
    %225 = vst [vmem:[#allocation5 + $0x60] sm:$0xff] %v195
    %226 = vst [vmem:[#allocation5 + $0x68] sm:$0xff] %v200
    %227 = vst [vmem:[#allocation5 + $0x70] sm:$0xff] %v205
    %228 = vst [vmem:[#allocation5 + $0x78] sm:$0xff] %v210
    %v229 = vld [vmem:[%s2] sm:$0xff]
    %v230 = vld [vmem:[%s2 + $0x8] sm:$0xff]
    %v231 = vld [vmem:[%s2 + $0x10] sm:$0xff]
    %v232 = vld [vmem:[%s2 + $0x18] sm:$0xff]
    %v233 = vld [vmem:[%s2 + $0x20] sm:$0xff]
    %v234 = vld [vmem:[%s2 + $0x28] sm:$0xff]
    %v235 = vld [vmem:[%s2 + $0x30] sm:$0xff]
    %v236 = vld [vmem:[%s2 + $0x38] sm:$0xff]
    %v237 = vld [vmem:[%s2 + $0x40] sm:$0xff]
    %v238 = vld [vmem:[%s2 + $0x48] sm:$0xff]
    %v239 = vld [vmem:[%s2 + $0x50] sm:$0xff]
    %v240 = vld [vmem:[%s2 + $0x58] sm:$0xff]
    %v241 = vld [vmem:[%s2 + $0x60] sm:$0xff]
    %v242 = vld [vmem:[%s2 + $0x68] sm:$0xff]
    %v243 = vld [vmem:[%s2 + $0x70] sm:$0xff]
    %v244 = vld [vmem:[%s2 + $0x78] sm:$0xff]
    %245 = vmatprep.subr.mxu0 0.0
    %246 = vmatpush1.msra.mxu0 %v229
    %247 = vmatprep.subr.mxu0 0.0
    %248 = vmatpush1.msra.mxu0 %v230
    %249 = vmatprep.subr.mxu0 0.0
    %250 = vmatpush1.msra.mxu0 %v231
    %251 = vmatprep.subr.mxu0 0.0
    %252 = vmatpush1.msra.mxu0 %v232
    %253 = vmatprep.subr.mxu0 0.0
    %254 = vmatpush1.msra.mxu0 %v233
    %255 = vmatprep.subr.mxu0 0.0
    %256 = vmatpush1.msra.mxu0 %v234
    %257 = vmatprep.subr.mxu0 0.0
    %258 = vmatpush1.msra.mxu0 %v235
    %259 = vmatprep.subr.mxu0 0.0
    %260 = vmatpush1.msra.mxu0 %v236
    %261 = vmatprep.subr.mxu0 0.0
    %262 = vmatpush1.msra.mxu0 %v237
    %263 = vmatprep.subr.mxu0 0.0
    %264 = vmatpush1.msra.mxu0 %v238
    %265 = vmatprep.subr.mxu0 0.0
    %266 = vmatpush1.msra.mxu0 %v239
    %267 = vmatprep.subr.mxu0 0.0
    %268 = vmatpush1.msra.mxu0 %v240
    %269 = vmatprep.subr.mxu0 0.0
    %270 = vmatpush1.msra.mxu0 %v241
    %271 = vmatprep.subr.mxu0 0.0
    %272 = vmatpush1.msra.mxu0 %v242
    %273 = vmatprep.subr.mxu0 0.0
    %274 = vmatpush1.msra.mxu0 %v243
    %275 = vmatprep.subr.mxu0 0.0
    %276 = vmatpush1.msra.mxu0 %v244
    %277 = vmatprep.subr.mxu0 0.0
    %278 = vmatpush1.msra.mxu0 0.0
    %279 = vmatprep.subr.mxu0 0.0
    %280 = vmatpush1.msra.mxu0 0.0
    %281 = vmatprep.subr.mxu0 0.0
    %282 = vmatpush1.msra.mxu0 0.0
    %283 = vmatprep.subr.mxu0 0.0
    %284 = vmatpush1.msra.mxu0 0.0
    %285 = vmatprep.subr.mxu0 0.0
    %286 = vmatpush1.msra.mxu0 0.0
    %287 = vmatprep.subr.mxu0 0.0
    %288 = vmatpush1.msra.mxu0 0.0
    %289 = vmatprep.subr.mxu0 0.0
    %290 = vmatpush1.msra.mxu0 0.0
    %291 = vmatprep.subr.mxu0 0.0
    %292 = vmatpush1.msra.mxu0 0.0
    %293 = vmatprep.subr.mxu0 0.0
    %294 = vmatpush1.msra.mxu0 0.0
    %295 = vmatprep.subr.mxu0 0.0
    %296 = vmatpush1.msra.mxu0 0.0
    %297 = vmatprep.subr.mxu0 0.0
    %298 = vmatpush1.msra.mxu0 0.0
    %299 = vmatprep.subr.mxu0 0.0
    %300 = vmatpush1.msra.mxu0 0.0
    %301 = vmatprep.subr.mxu0 0.0
    %302 = vmatpush1.msra.mxu0 0.0
    %303 = vmatprep.subr.mxu0 0.0
    %304 = vmatpush1.msra.mxu0 0.0
    %305 = vmatprep.subr.mxu0 0.0
    %306 = vmatpush1.msra.mxu0 0.0
    %307 = vmatprep.subr.mxu0 0.0
    %308 = vmatpush1.msra.mxu0 0.0
    %309 = vmatprep.mubr.f32.mxu0 0.0
    %310 = vmatmul.mubr.f32.gmra.mrb[0].mxu0 %v36
    %v311 = vpop.f32.mrb[0].mxu0
    %v312 = vadd.f32 0.0, %v311
    %v313 = vpop.f32.mrb[0].mxu0
    %314 = vmatprep.mubr.f32.mxu0 0.0
    %315 = vmatmul.mubr.f32.gmra.mrb[0].mxu0 %v37
    %v316 = vpop.f32.mrb[0].mxu0
    %v317 = vadd.f32 0.0, %v316
    %v318 = vpop.f32.mrb[0].mxu0
    %319 = vmatprep.mubr.f32.mxu0 0.0
    %320 = vmatmul.mubr.f32.gmra.mrb[0].mxu0 %v38
    %v321 = vpop.f32.mrb[0].mxu0
    %v322 = vadd.f32 0.0, %v321
    %v323 = vpop.f32.mrb[0].mxu0
    %324 = vmatprep.mubr.f32.mxu0 0.0
    %325 = vmatmul.mubr.f32.gmra.mrb[0].mxu0 %v39
    %v326 = vpop.f32.mrb[0].mxu0
    %v327 = vadd.f32 0.0, %v326
    %v328 = vpop.f32.mrb[0].mxu0
    %329 = vmatprep.mubr.f32.mxu0 0.0
    %330 = vmatmul.mubr.f32.gmra.mrb[0].mxu0 %v40
    %v331 = vpop.f32.mrb[0].mxu0
    %v332 = vadd.f32 0.0, %v331
    %v333 = vpop.f32.mrb[0].mxu0
    %334 = vmatprep.mubr.f32.mxu0 0.0
    %335 = vmatmul.mubr.f32.gmra.mrb[0].mxu0 %v41
    %v336 = vpop.f32.mrb[0].mxu0
    %v337 = vadd.f32 0.0, %v336
    %v338 = vpop.f32.mrb[0].mxu0
    %339 = vmatprep.mubr.f32.mxu0 0.0
    %340 = vmatmul.mubr.f32.gmra.mrb[0].mxu0 %v42
    %v341 = vpop.f32.mrb[0].mxu0
    %v342 = vadd.f32 0.0, %v341
    %v343 = vpop.f32.mrb[0].mxu0
    %344 = vmatprep.mubr.f32.mxu0 0.0
    %345 = vmatmul.mubr.f32.gmra.mrb[0].mxu0 %v43
    %v346 = vpop.f32.mrb[0].mxu0
    %v347 = vadd.f32 0.0, %v346
    %v348 = vpop.f32.mrb[0].mxu0
    %349 = vmatprep.mubr.f32.mxu0 0.0
    %350 = vmatmul.mubr.f32.gmra.mrb[0].mxu0 %v44
    %v351 = vpop.f32.mrb[0].mxu0
    %v352 = vadd.f32 0.0, %v351
    %v353 = vpop.f32.mrb[0].mxu0
    %354 = vmatprep.mubr.f32.mxu0 0.0
    %355 = vmatmul.mubr.f32.gmra.mrb[0].mxu0 %v45
    %v356 = vpop.f32.mrb[0].mxu0
    %v357 = vadd.f32 0.0, %v356
    %v358 = vpop.f32.mrb[0].mxu0
    %359 = vmatprep.mubr.f32.mxu0 0.0
    %360 = vmatmul.mubr.f32.gmra.mrb[0].mxu0 %v46
    %v361 = vpop.f32.mrb[0].mxu0
    %v362 = vadd.f32 0.0, %v361
    %v363 = vpop.f32.mrb[0].mxu0
    %364 = vmatprep.mubr.f32.mxu0 0.0
    %365 = vmatmul.mubr.f32.gmra.mrb[0].mxu0 %v47
    %v366 = vpop.f32.mrb[0].mxu0
    %v367 = vadd.f32 0.0, %v366
    %v368 = vpop.f32.mrb[0].mxu0
    %369 = vmatprep.mubr.f32.mxu0 0.0
    %370 = vmatmul.mubr.f32.gmra.mrb[0].mxu0 %v48
    %v371 = vpop.f32.mrb[0].mxu0
    %v372 = vadd.f32 0.0, %v371
    %v373 = vpop.f32.mrb[0].mxu0
    %374 = vmatprep.mubr.f32.mxu0 0.0
    %375 = vmatmul.mubr.f32.gmra.mrb[0].mxu0 %v49
    %v376 = vpop.f32.mrb[0].mxu0
    %v377 = vadd.f32 0.0, %v376
    %v378 = vpop.f32.mrb[0].mxu0
    %379 = vmatprep.mubr.f32.mxu0 0.0
    %380 = vmatmul.mubr.f32.gmra.mrb[0].mxu0 %v50
    %v381 = vpop.f32.mrb[0].mxu0
    %v382 = vadd.f32 0.0, %v381
    %v383 = vpop.f32.mrb[0].mxu0
    %384 = vmatprep.mubr.f32.mxu0 0.0
    %385 = vmatmul.mubr.f32.gmra.mrb[0].mxu0 %v51
    %v386 = vpop.f32.mrb[0].mxu0
    %v387 = vadd.f32 0.0, %v386
    %v388 = vpop.f32.mrb[0].mxu0
    %389 = vdwg.mxu0
    %vm390 = vcmask 64512
    %391 = vst.msk [vmem:[%s5] sm:$0xff] %vm390, %v312
    %392 = vst.msk [vmem:[%s5 + $0x8] sm:$0xff] %vm390, %v317
    %393 = vst.msk [vmem:[%s5 + $0x10] sm:$0xff] %vm390, %v322
    %394 = vst.msk [vmem:[%s5 + $0x18] sm:$0xff] %vm390, %v327
    %395 = vst.msk [vmem:[%s5 + $0x20] sm:$0xff] %vm390, %v332
    %396 = vst.msk [vmem:[%s5 + $0x28] sm:$0xff] %vm390, %v337
    %397 = vst.msk [vmem:[%s5 + $0x30] sm:$0xff] %vm390, %v342
    %398 = vst.msk [vmem:[%s5 + $0x38] sm:$0xff] %vm390, %v347
    %399 = vst.msk [vmem:[%s5 + $0x40] sm:$0xff] %vm390, %v352
    %400 = vst.msk [vmem:[%s5 + $0x48] sm:$0xff] %vm390, %v357
    %401 = vst.msk [vmem:[%s5 + $0x50] sm:$0xff] %vm390, %v362
    %402 = vst.msk [vmem:[%s5 + $0x58] sm:$0xff] %vm390, %v367
    %403 = vst.msk [vmem:[%s5 + $0x60] sm:$0xff] %vm390, %v372
    %404 = vst.msk [vmem:[%s5 + $0x68] sm:$0xff] %vm390, %v377
    %405 = vst.msk [vmem:[%s5 + $0x70] sm:$0xff] %vm390, %v382
    %406 = vst.msk [vmem:[%s5 + $0x78] sm:$0xff] %vm390, %v387
    %v407 = vld [vmem:[%s3] sm:$0xff]
    %408 = vmatprep.subr.mxu0 0.0
    %409 = vmatpush1.xpose.msra.mxu0 %v36
    %410 = vmatprep.subr.mxu0 0.0
    %411 = vmatpush1.xpose.msra.mxu0 %v37
    %412 = vmatprep.subr.mxu0 0.0
    %413 = vmatpush1.xpose.msra.mxu0 %v38
    %414 = vmatprep.subr.mxu0 0.0
    %415 = vmatpush1.xpose.msra.mxu0 %v39
    %416 = vmatprep.subr.mxu0 0.0
    %417 = vmatpush1.xpose.msra.mxu0 %v40
    %418 = vmatprep.subr.mxu0 0.0
    %419 = vmatpush1.xpose.msra.mxu0 %v41
    %420 = vmatprep.subr.mxu0 0.0
    %421 = vmatpush1.xpose.msra.mxu0 %v42
    %422 = vmatprep.subr.mxu0 0.0
    %423 = vmatpush1.xpose.msra.mxu0 %v43
    %424 = vmatprep.subr.mxu0 0.0
    %425 = vmatpush1.xpose.msra.mxu0 %v44
    %426 = vmatprep.subr.mxu0 0.0
    %427 = vmatpush1.xpose.msra.mxu0 %v45
    %428 = vmatprep.subr.mxu0 0.0
    %429 = vmatpush1.xpose.msra.mxu0 %v46
    %430 = vmatprep.subr.mxu0 0.0
    %431 = vmatpush1.xpose.msra.mxu0 %v47
    %432 = vmatprep.subr.mxu0 0.0
    %433 = vmatpush1.xpose.msra.mxu0 %v48
    %434 = vmatprep.subr.mxu0 0.0
    %435 = vmatpush1.xpose.msra.mxu0 %v49
    %436 = vmatprep.subr.mxu0 0.0
    %437 = vmatpush1.xpose.msra.mxu0 %v50
    %438 = vmatprep.subr.mxu0 0.0
    %439 = vmatpush1.xpose.msra.mxu0 %v51
    %440 = vmatprep.subr.mxu0 0.0
    %441 = vmatpush1.xpose.msra.mxu0 0.0
    %442 = vmatprep.subr.mxu0 0.0
    %443 = vmatpush1.xpose.msra.mxu0 0.0
    %444 = vmatprep.subr.mxu0 0.0
    %445 = vmatpush1.xpose.msra.mxu0 0.0
    %446 = vmatprep.subr.mxu0 0.0
    %447 = vmatpush1.xpose.msra.mxu0 0.0
    %448 = vmatprep.subr.mxu0 0.0
    %449 = vmatpush1.xpose.msra.mxu0 0.0
    %450 = vmatprep.subr.mxu0 0.0
    %451 = vmatpush1.xpose.msra.mxu0 0.0
    %452 = vmatprep.subr.mxu0 0.0
    %453 = vmatpush1.xpose.msra.mxu0 0.0
    %454 = vmatprep.subr.mxu0 0.0
    %455 = vmatpush1.xpose.msra.mxu0 0.0
    %456 = vmatprep.subr.mxu0 0.0
    %457 = vmatpush1.xpose.msra.mxu0 0.0
    %458 = vmatprep.subr.mxu0 0.0
    %459 = vmatpush1.xpose.msra.mxu0 0.0
    %460 = vmatprep.subr.mxu0 0.0
    %461 = vmatpush1.xpose.msra.mxu0 0.0
    %462 = vmatprep.subr.mxu0 0.0
    %463 = vmatpush1.xpose.msra.mxu0 0.0
    %464 = vmatprep.subr.mxu0 0.0
    %465 = vmatpush1.xpose.msra.mxu0 0.0
    %466 = vmatprep.subr.mxu0 0.0
    %467 = vmatpush1.xpose.msra.mxu0 0.0
    %468 = vmatprep.subr.mxu0 0.0
    %469 = vmatpush1.xpose.msra.mxu0 0.0
    %470 = vmatprep.subr.mxu0 0.0
    %471 = vmatpush1.xpose.msra.mxu0 0.0
    %472 = vmatprep.mubr.f32.mxu0 0.0
    %473 = vmatmul.mubr.f32.gmra.mrb[0].mxu0 %v407
    %v474 = vpop.f32.mrb[0].mxu0
    %v475 = vadd.f32 0.0, %v474
    %v476 = vpop.f32.mrb[0].mxu0
    %477 = vdwg.mxu0
    %478 = vst [vmem:[#allocation6] sm:$0xff] %v475
    // Predicated region
    $region22: #{tpu_custom_call.1} parent=1 // pred_check
      _
    $region23: #{tpu_custom_call.1} parent=1 // pred_check_branch
      %480 = sbr.rel (0) target = $region25
    $region24: #{tpu_custom_call.1} parent=1 // pred_region
      %s482 = ssub.s32 2048, 2048
      %483 = vsyncadd [#allocation4], %s482
      %s484 = sshll.u32 [#allocation5], 4
      %s485 = int_to_ptr.vmem [resolvable:$true] %s484
      %490 = dma.vmem_to_hbm [thread:$0]  %s485, 2048, %s4, [#allocation4], 128, 128, 8
    $region25: #{tpu_custom_call.1} parent=1 // pred_fallthru
      _
    // Predicated region
    $region26: #{tpu_custom_call.1} parent=1 // pred_check
      _
    $region27: #{tpu_custom_call.1} parent=1 // pred_check_branch
      %492 = sbr.rel (0) target = $region29
    $region28: #{tpu_custom_call.1} parent=1 // pred_region
      _
    $region29: #{tpu_custom_call.1} parent=1 // pred_fallthru
      _
    // Predicated region
    $region30: #{tpu_custom_call.1} parent=1 // pred_check
      _
    $region31: #{tpu_custom_call.1} parent=1 // pred_check_branch
      %494 = sbr.rel (0) target = $region33
    $region32: #{tpu_custom_call.1} parent=1 // pred_region
      %s496 = ssub.s32 128, 128
      %497 = vsyncadd [#allocation7], %s496
      %s499 = sshll.u32 [#allocation6], 4
      %s500 = int_to_ptr.vmem [resolvable:$true] %s499
      %502 = dma.vmem_to_hbm [thread:$0]  %s500, 128, %s6, [#allocation7]
    $region33: #{tpu_custom_call.1} parent=1 // pred_fallthru
      _
    // Predicated region
    $region34: #{tpu_custom_call.1} parent=1 // pred_check
      _
    $region35: #{tpu_custom_call.1} parent=1 // pred_check_branch
      %504 = sbr.rel (0) target = $region37
    $region36: #{tpu_custom_call.1} parent=1 // pred_region
      %505 = dma.done [#allocation4], 2048
    $region37: #{tpu_custom_call.1} parent=1 // pred_fallthru
      _
    // Predicated region
    $region38: #{tpu_custom_call.1} parent=1 // pred_check
      _
    $region39: #{tpu_custom_call.1} parent=1 // pred_check_branch
      %507 = sbr.rel (0) target = $region41
    $region40: #{tpu_custom_call.1} parent=1 // pred_region
      _
    $region41: #{tpu_custom_call.1} parent=1 // pred_fallthru
      _
    // Predicated region
    $region42: #{tpu_custom_call.1} parent=1 // pred_check
      _
    $region43: #{tpu_custom_call.1} parent=1 // pred_check_branch
      %509 = sbr.rel (0) target = $region45
    $region44: #{tpu_custom_call.1} parent=1 // pred_region
      %510 = dma.done [#allocation7], 128
    $region45: #{tpu_custom_call.1} parent=1 // pred_fallthru
      _
    %511 = vsyncpa [#allocation3], 1
    %512 = vsyncpa [#allocation4], 1
    %513 = vsyncpa [#allocation7], 1

</llo_original>
